<compile_context>
chip_gen: v5e
topology: v5e:2x2
jax: 0.10.0
libtpu: 0.0.40
codegen_flags: <defaults>
</compile_context>

<pallas_src>
import functools
import math

import jax
import jax.numpy as jnp
from jax.experimental import pallas as pl
from jax.experimental.pallas import tpu as pltpu

OUT_PAD = 128  # lane-dense padding of the 5-dim attention output, per batch block


# ---------------------------------------------------------------------------
# Pallas kernel: MultiTimeAttention core (single invocation, everything VMEM).
# ---------------------------------------------------------------------------
def mtan_attention_kernel(qk_ref, qb_ref, ktT_ref, rhs_ref, uni_ref, kval_ref,
                          wo_blk_ref, bo_blk_ref, out_ref,
                          *, lq, num_heads, bd, out_cols):
    """qk_ref    : (H*Lq, E)      precomputed head-masked/scaled Q folded through Wk
       qb_ref    : (H*Lq, 1)      folded k-projection bias contribution (row constant)
       ktT_ref   : (E, B*Lk)      key time embeddings, pre-transposed
       rhs_ref   : (B*Lk, 2*B*D)  block-diag [mask*value | mask] (num cols | den cols)
       uni_ref   : (1, B*D)       per-(batch,channel) uniform-average fallback
       kval_ref  : (1, B*Lk)      1.0 iff the key has >=1 unmasked channel
       wo_blk_ref: (H, B*D, B*128) block-diag per-head output projection (zero padded)
       bo_blk_ref: (1, B*128)
       out_ref   : (Lq, B*128)    lane-dense attention output slab
    """
    f32 = jnp.float32

    # Scores for ALL heads and ALL batches in one MXU matmul.
    s = jnp.dot(qk_ref[...], ktT_ref[...], preferred_element_type=f32) + qb_ref[...]

    # Softmax shift over keys that have at least one unmasked channel; fully-masked
    # (padding) keys are driven to e == 0 so they never dominate the shift.
    s = jnp.where(kval_ref[...] > 0.0, s, -1e30)
    e = jnp.exp(s - jnp.max(s, axis=-1, keepdims=True))            # (H*Lq, B*Lk)

    # masked_fill(-1e9)+softmax+weighted-sum  ==  (e @ (m*v)) / (e @ m); numerator and
    # denominator of every batch come out of ONE matmul against the block-diag RHS.
    nd = jnp.dot(e, rhs_ref[...], preferred_element_type=f32)      # (H*Lq, 2*B*D)
    num = nd[:, :bd]
    den = nd[:, bd:]
    # Fully-masked channel -> reference softmax degenerates to a uniform average.
    ratio = jnp.where(den > 0.0, num / jnp.where(den > 0.0, den, 1.0), uni_ref[...])

    # Output projection accumulated per head (no cross-lane concatenation).
    acc = jnp.zeros((lq, out_cols), f32)
    for h in range(num_heads):
        acc = acc + jnp.dot(ratio[h * lq:(h + 1) * lq, :], wo_blk_ref[h],
                            preferred_element_type=f32)
    out_ref[...] = acc + bo_blk_ref[...]


# ---------------------------------------------------------------------------
# Parameter init (torch-default-like) and parameter-only precomputation.
# ---------------------------------------------------------------------------
def init_mtan_params(key, input_dim, embed_time, num_heads, init_embed=8):
    E, D = embed_time, 2 * input_dim

    def lin(k, fan_in, shape):
        b = 1.0 / math.sqrt(fan_in)
        return jax.random.uniform(k, shape, jnp.float32, -b, b)

    ks = iter(jax.random.split(key, 26))
    p = {}
    p["w_lin"] = lin(next(ks), 1, (1, 1));        p["b_lin"] = lin(next(ks), 1, (1,))
    p["w_per"] = lin(next(ks), 1, (E - 1, 1));    p["b_per"] = lin(next(ks), 1, (E - 1,))
    p["Wq"] = lin(next(ks), E, (E, E));           p["bq"] = lin(next(ks), E, (E,))
    p["Wk"] = lin(next(ks), E, (E, E));           p["bk"] = lin(next(ks), E, (E,))
    p["Wo"] = lin(next(ks), D * num_heads, (5, D * num_heads))
    p["bo"] = lin(next(ks), D * num_heads, (5,))
    # nn.RNN(embed_time, embed_time)
    p["Wih"] = lin(next(ks), E, (E, E));          p["bih"] = lin(next(ks), E, (E,))
    p["Whh"] = lin(next(ks), E, (E, E));          p["bhh"] = lin(next(ks), E, (E,))
    # regressor: Linear(E,128) -> Linear(128,128) -> Linear(128,E) -> Linear(E,init_embed)
    p["Wr1"] = lin(next(ks), E, (128, E));        p["br1"] = lin(next(ks), E, (128,))
    p["Wr2"] = lin(next(ks), 128, (128, 128));    p["br2"] = lin(next(ks), 128, (128,))
    p["Wr3"] = lin(next(ks), 128, (E, 128));      p["br3"] = lin(next(ks), 128, (E,))
    p["Wr4"] = lin(next(ks), E, (init_embed, E)); p["br4"] = lin(next(ks), E, (init_embed,))
    return p


def time_embedding(tt, w_lin, b_lin, w_per, b_per):
    """learn_time_embedding on a 1-D vector of times -> (len(tt), E)."""
    tt = tt[:, None].astype(jnp.float32)
    out1 = tt * w_lin[0, 0] + b_lin[0]
    out2 = jnp.sin(tt * w_per[:, 0] + b_per)
    return jnp.concatenate([out1, out2], axis=-1)


def precompute_consts(p, query_times, num_heads, batch):
    """Hoist everything that depends only on parameters / the fixed query buffer."""
    f32 = jnp.float32
    E = p["Wq"].shape[0]
    dk = E // num_heads
    lq = query_times.shape[0]
    out_dim, hd = p["Wo"].shape                       # (5, H*D)
    D = hd // num_heads

    # Query side: time embedding -> Q projection -> head replicate + head mask with
    # 1/sqrt(dk) folded in -> fold through the K projection weight/bias so the
    # per-call score matmul contracts directly with the raw key time embedding.
    q_emb = time_embedding(query_times, p["w_lin"], p["b_lin"], p["w_per"], p["b_per"])
    qp = q_emb @ p["Wq"].T + p["bq"]                                      # (Lq, E)
    rows = num_heads * lq
    head = jnp.arange(rows)[:, None] // lq
    col = jnp.arange(E)[None, :]
    qmask = jnp.where(col // dk == head, 1.0 / math.sqrt(dk), 0.0).astype(f32)
    qbig = jnp.tile(qp, (num_heads, 1)) * qmask                           # (H*Lq, E)
    qk = (qbig @ p["Wk"]).astype(f32)                                     # (H*Lq, E)
    qb = (qbig @ p["bk"]).reshape(rows, 1).astype(f32)                    # (H*Lq, 1)

    # Block-diagonal (per batch) per-head output projection, 128-lane padded.
    WoT = p["Wo"].T.astype(f32)                                           # (H*D, 5)
    wo_blk = jnp.zeros((num_heads, batch * D, batch * OUT_PAD), f32)
    bo_blk = jnp.zeros((1, batch * OUT_PAD), f32)
    for h in range(num_heads):
        for b in range(batch):
            wo_blk = wo_blk.at[h, b * D:(b + 1) * D,
                               b * OUT_PAD:b * OUT_PAD + out_dim].set(
                WoT[h * D:(h + 1) * D, :])
    for b in range(batch):
        bo_blk = bo_blk.at[0, b * OUT_PAD:b * OUT_PAD + out_dim].set(p["bo"])

    # The regressor is 4 Linears with no nonlinearity -> compose into one affine map.
    Wr = p["Wr4"] @ p["Wr3"] @ p["Wr2"] @ p["Wr1"]                        # (init_embed, E)
    br = (((p["br1"] @ p["Wr2"].T + p["br2"]) @ p["Wr3"].T + p["br3"])
          @ p["Wr4"].T + p["br4"])

    return dict(qk=qk, qb=qb, wo_blk=wo_blk, bo_blk=bo_blk,
                w_lin=p["w_lin"].astype(f32).reshape(1, 1),
                b_lin=p["b_lin"].astype(f32).reshape(1, 1),
                w_per=p["w_per"].astype(f32),
                b_per=p["b_per"].astype(f32).reshape(-1, 1),
                Wih=p["Wih"].astype(f32), bih=p["bih"].astype(f32),
                Whh=p["Whh"].astype(f32), bhh=p["bhh"].astype(f32),
                Wr=Wr.astype(f32), br=br.astype(f32))


# ---------------------------------------------------------------------------
# Jitted forward: tiny front-end + Pallas attention kernel + RNN/regressor tail.
# ---------------------------------------------------------------------------
def make_forward(num_heads, out_dim):
    @jax.jit
    def forward(consts, x, time_steps, mask):
        f32 = jnp.float32
        B, Lk, _ = x.shape
        E = consts["qk"].shape[1]
        Lq = consts["qk"].shape[0] // num_heads

        x = x.astype(f32)
        mask = mask.astype(f32)

        # Key time embedding, built directly in transposed (E, B*Lk) layout.
        tt = time_steps.astype(f32).reshape(1, B * Lk)
        kt_T = jnp.concatenate(
            [consts["w_lin"] * tt + consts["b_lin"],
             jnp.sin(consts["w_per"] * tt + consts["b_per"])], axis=0)

        value = jnp.concatenate([x, mask], axis=-1)                  # (B, Lk, D)
        am = jnp.concatenate([mask, mask], axis=-1)                  # (B, Lk, D)
        D = value.shape[-1]
        BD = B * D
        mv = am * value
        # Block-diagonal [mask*value | mask] RHS: num columns first, den columns after.
        rhs = jnp.zeros((B * Lk, 2 * BD), f32)
        for b in range(B):
            rhs = rhs.at[b * Lk:(b + 1) * Lk, b * D:(b + 1) * D].set(mv[b])
            rhs = rhs.at[b * Lk:(b + 1) * Lk, BD + b * D:BD + (b + 1) * D].set(am[b])
        uniform = jnp.mean(value, axis=1).reshape(1, BD)
        kvalid = (jnp.max(mask, axis=-1) > 0).astype(f32).reshape(1, B * Lk)

        out_cols = B * OUT_PAD
        kernel = functools.partial(mtan_attention_kernel, lq=Lq,
                                   num_heads=num_heads, bd=BD, out_cols=out_cols)
        att = pl.pallas_call(
            kernel,
            out_shape=jax.ShapeDtypeStruct((Lq, out_cols), f32),
            in_specs=[pl.BlockSpec(memory_space=pltpu.MemorySpace.VMEM)] * 8,
            out_specs=pl.BlockSpec(memory_space=pltpu.MemorySpace.VMEM),
        )(consts["qk"], consts["qb"], kt_T, rhs, uniform, kvalid,
          consts["wo_blk"], consts["bo_blk"])
        att = att.reshape(Lq, B, OUT_PAD)[:, :, :out_dim].transpose(1, 0, 2)  # (B,Lq,5)

        # TODO(synk): the sequential nn.RNN recurrence and regressor head have no
        # efficient single-kernel Pallas mapping at these tiny sizes; they run as
        # XLA ops fused under this same jit (regressor pre-composed at init).
        h = jnp.zeros((B, E), f32)
        for t in range(Lq):
            h = jnp.tanh(att[:, t, :] @ consts["Wih"].T + consts["bih"]
                         + h @ consts["Whh"].T + consts["bhh"])
        return h @ consts["Wr"].T + consts["br"]                      # (B, init_embed)

    return forward


# ---------------------------------------------------------------------------
# Pure-JAX reference: literal transcription of the PyTorch forward.
# ---------------------------------------------------------------------------
def mtan_reference(p, x, time_steps, mask, query_times, num_heads):
    f32 = jnp.float32
    x = x.astype(f32)
    mask = mask.astype(f32)
    B, Lk, _ = x.shape
    E = p["Wq"].shape[0]
    dk = E // num_heads
    value = jnp.concatenate([x, mask], axis=-1)                       # (B, Lk, D)
    am = jnp.concatenate([mask, mask], axis=-1)
    D = value.shape[-1]
    key = time_embedding(time_steps.reshape(-1), p["w_lin"], p["b_lin"],
                         p["w_per"], p["b_per"]).reshape(B, Lk, E)
    query = time_embedding(query_times, p["w_lin"], p["b_lin"], p["w_per"], p["b_per"])
    Lq = query.shape[0]

    qp = query @ p["Wq"].T + p["bq"]                                  # (Lq, E)
    kp = key @ p["Wk"].T + p["bk"]                                    # (B, Lk, E)
    q = qp.reshape(Lq, num_heads, dk).transpose(1, 0, 2)              # (H, Lq, dk)
    k = kp.reshape(B, Lk, num_heads, dk).transpose(0, 2, 1, 3)        # (B, H, Lk, dk)
    scores = jnp.einsum("hqd,bhkd->bhqk", q, k) / math.sqrt(dk)
    scores = jnp.repeat(scores[..., None], D, axis=-1)                # (B,H,Lq,Lk,D)
    scores = jnp.where(am[:, None, None, :, :] == 0, -1000000000.0, scores)
    p_attn = jax.nn.softmax(scores, axis=-2)
    att = jnp.sum(p_attn * value[:, None, None, :, :], axis=-2)       # (B,H,Lq,D)
    att = att.transpose(0, 2, 1, 3).reshape(B, Lq, num_heads * D)
    att = att @ p["Wo"].T + p["bo"]                                   # (B, Lq, 5)

    h = jnp.zeros((B, E), f32)                                        # nn.RNN, h0 = 0
    for t in range(Lq):
        h = jnp.tanh(att[:, t, :] @ p["Wih"].T + p["bih"]
                     + h @ p["Whh"].T + p["bhh"])
    out = h                                                           # h_n.squeeze()
    out = out @ p["Wr1"].T + p["br1"]
    out = out @ p["Wr2"].T + p["br2"]
    out = out @ p["Wr3"].T + p["br3"]
    out = out @ p["Wr4"].T + p["br4"]
    return out


if __name__ == "__main__":
    # Shapes consistent with the module: the attention output is hard-coded to 5
    # features and feeds nn.RNN(embed_time, embed_time), so embed_time must be 5.
    B, Lk, Lq = 2, 8, 8
    input_dim = 2            # -> attention value dim D = 2*input_dim = 4
    embed_time = 5
    num_heads = 5            # embed_time % num_heads == 0
    init_embed = 8

    kx, km, kt, kp = jax.random.split(jax.random.PRNGKey(0), 4)
    x = jax.random.normal(kx, (B, Lk, input_dim), jnp.float32)
    mask = (jax.random.uniform(km, (B, Lk, input_dim)) > 0.3).astype(jnp.float32)
    time_steps = jax.random.uniform(kt, (B, Lk), jnp.float32)
    query_times = jnp.linspace(0.0, 1.0, Lq, dtype=jnp.float32)       # self.query

    params = init_mtan_params(kp, input_dim, embed_time, num_heads, init_embed)
    consts = precompute_consts(params, query_times, num_heads, B)
    forward = make_forward(num_heads, out_dim=params["Wo"].shape[0])

    out = jax.block_until_ready(forward(consts, x, time_steps, mask))
    ref = mtan_reference(params, x, time_steps, mask, query_times, num_heads)

    assert out.shape == (B, init_embed), out.shape
    err = float(jnp.max(jnp.abs(out - ref)))
    assert err < 1e-3, f"max abs err {err}"
    print("KERNEL_OK")
</pallas_src>

<mosaic_0001>
module attributes {stable_mosaic.version = 11 : i64} {
  func.func @mtan_attention_kernel(%arg0: memref<40x5xf32, #tpu.memory_space<vmem>>, %arg1: memref<40x1xf32, #tpu.memory_space<vmem>>, %arg2: memref<5x16xf32, #tpu.memory_space<vmem>>, %arg3: memref<16x16xf32, #tpu.memory_space<vmem>>, %arg4: memref<1x8xf32, #tpu.memory_space<vmem>>, %arg5: memref<1x16xf32, #tpu.memory_space<vmem>>, %arg6: memref<5x8x256xf32, #tpu.memory_space<vmem>>, %arg7: memref<1x256xf32, #tpu.memory_space<vmem>>, %arg8: memref<8x256xf32, #tpu.memory_space<vmem>>) attributes {dimension_semantics = [], scalar_prefetch = 0 : i64, scratch_operands = 0 : i64, tpu.core_type = #tpu.core_type<tc>} {
    %c0 = arith.constant 0 : index
    %c0_0 = arith.constant 0 : index
    %0 = vector.load %arg0[%c0, %c0_0] : memref<40x5xf32, #tpu.memory_space<vmem>>, vector<40x5xf32>
    %c0_1 = arith.constant 0 : index
    %c0_2 = arith.constant 0 : index
    %1 = vector.load %arg2[%c0_1, %c0_2] : memref<5x16xf32, #tpu.memory_space<vmem>>, vector<5x16xf32>
    %cst = arith.constant dense<0.000000e+00> : vector<40x16xf32>
    %2 = tpu.matmul %0, %1, %cst {dimension_numbers = #tpu.dot_dimension_numbers<[1], [0], [0], [1], [0, 0, 1, 1], [], []>} : vector<40x5xf32>, vector<5x16xf32>, vector<40x16xf32> -> vector<40x16xf32>
    %c0_3 = arith.constant 0 : index
    %c0_4 = arith.constant 0 : index
    %3 = vector.load %arg1[%c0_3, %c0_4] : memref<40x1xf32, #tpu.memory_space<vmem>>, vector<40x1xf32>
    %4 = vector.broadcast %3 : vector<40x1xf32> to vector<40x16xf32>
    %5 = arith.addf %2, %4 : vector<40x16xf32>
    %c0_5 = arith.constant 0 : index
    %c0_6 = arith.constant 0 : index
    %6 = vector.load %arg5[%c0_5, %c0_6] : memref<1x16xf32, #tpu.memory_space<vmem>>, vector<1x16xf32>
    %cst_7 = arith.constant 0.000000e+00 : f32
    %7 = vector.broadcast %cst_7 : f32 to vector<1x16xf32>
    %8 = arith.cmpf ogt, %6, %7 : vector<1x16xf32>
    %cst_8 = arith.constant -1.000000e+30 : f32
    %9 = vector.shape_cast %8 : vector<1x16xi1> to vector<1x16xi1>
    %10 = vector.broadcast %9 : vector<1x16xi1> to vector<40x16xi1>
    %11 = vector.broadcast %cst_8 : f32 to vector<40x16xf32>
    %12 = arith.select %10, %5, %11 : vector<40x16xi1>, vector<40x16xf32>
    %cst_9 = arith.constant dense<0xFF800000> : vector<40xf32>
    %13 = vector.multi_reduction <maximumf>, %12, %cst_9 [1] : vector<40x16xf32> to vector<40xf32>
    %14 = vector.shape_cast %13 : vector<40xf32> to vector<40x1xf32>
    %15 = vector.broadcast %14 : vector<40x1xf32> to vector<40x16xf32>
    %16 = arith.subf %12, %15 : vector<40x16xf32>
    %17 = math.exp %16 : vector<40x16xf32>
    %c0_10 = arith.constant 0 : index
    %c0_11 = arith.constant 0 : index
    %18 = vector.load %arg3[%c0_10, %c0_11] : memref<16x16xf32, #tpu.memory_space<vmem>>, vector<16x16xf32>
    %cst_12 = arith.constant dense<0.000000e+00> : vector<40x16xf32>
    %19 = tpu.matmul %17, %18, %cst_12 {dimension_numbers = #tpu.dot_dimension_numbers<[1], [0], [0], [1], [0, 0, 1, 1], [], []>} : vector<40x16xf32>, vector<16x16xf32>, vector<40x16xf32> -> vector<40x16xf32>
    %20 = vector.extract_strided_slice %19 {offsets = [0, 0], sizes = [40, 8], strides = [1, 1]} : vector<40x16xf32> to vector<40x8xf32>
    %21 = vector.extract_strided_slice %19 {offsets = [0, 8], sizes = [40, 8], strides = [1, 1]} : vector<40x16xf32> to vector<40x8xf32>
    %cst_13 = arith.constant 0.000000e+00 : f32
    %22 = vector.broadcast %cst_13 : f32 to vector<40x8xf32>
    %23 = arith.cmpf ogt, %21, %22 : vector<40x8xf32>
    %cst_14 = arith.constant 0.000000e+00 : f32
    %24 = vector.broadcast %cst_14 : f32 to vector<40x8xf32>
    %25 = arith.cmpf ogt, %21, %24 : vector<40x8xf32>
    %cst_15 = arith.constant 1.000000e+00 : f32
    %26 = vector.broadcast %cst_15 : f32 to vector<40x8xf32>
    %27 = arith.select %25, %21, %26 : vector<40x8xi1>, vector<40x8xf32>
    %28 = arith.divf %20, %27 : vector<40x8xf32>
    %c0_16 = arith.constant 0 : index
    %c0_17 = arith.constant 0 : index
    %29 = vector.load %arg4[%c0_16, %c0_17] : memref<1x8xf32, #tpu.memory_space<vmem>>, vector<1x8xf32>
    %30 = vector.shape_cast %29 : vector<1x8xf32> to vector<1x8xf32>
    %31 = vector.broadcast %30 : vector<1x8xf32> to vector<40x8xf32>
    %32 = arith.select %23, %28, %31 : vector<40x8xi1>, vector<40x8xf32>
    %cst_18 = arith.constant 0.000000e+00 : f32
    %33 = vector.broadcast %cst_18 : f32 to vector<8x256xf32>
    %34 = vector.extract_strided_slice %32 {offsets = [0, 0], sizes = [8, 8], strides = [1, 1]} : vector<40x8xf32> to vector<8x8xf32>
    %c0_19 = arith.constant 0 : index
    %c0_20 = arith.constant 0 : index
    %c0_21 = arith.constant 0 : index
    %35 = vector.load %arg6[%c0_19, %c0_20, %c0_21] : memref<5x8x256xf32, #tpu.memory_space<vmem>>, vector<1x8x256xf32>
    %36 = vector.shape_cast %35 : vector<1x8x256xf32> to vector<8x256xf32>
    %cst_22 = arith.constant dense<0.000000e+00> : vector<8x256xf32>
    %37 = tpu.matmul %34, %36, %cst_22 {dimension_numbers = #tpu.dot_dimension_numbers<[1], [0], [0], [1], [0, 0, 1, 1], [], []>} : vector<8x8xf32>, vector<8x256xf32>, vector<8x256xf32> -> vector<8x256xf32>
    %38 = arith.addf %33, %37 : vector<8x256xf32>
    %39 = vector.extract_strided_slice %32 {offsets = [8, 0], sizes = [8, 8], strides = [1, 1]} : vector<40x8xf32> to vector<8x8xf32>
    %c1 = arith.constant 1 : index
    %c0_23 = arith.constant 0 : index
    %c0_24 = arith.constant 0 : index
    %40 = vector.load %arg6[%c1, %c0_23, %c0_24] : memref<5x8x256xf32, #tpu.memory_space<vmem>>, vector<1x8x256xf32>
    %41 = vector.shape_cast %40 : vector<1x8x256xf32> to vector<8x256xf32>
    %cst_25 = arith.constant dense<0.000000e+00> : vector<8x256xf32>
    %42 = tpu.matmul %39, %41, %cst_25 {dimension_numbers = #tpu.dot_dimension_numbers<[1], [0], [0], [1], [0, 0, 1, 1], [], []>} : vector<8x8xf32>, vector<8x256xf32>, vector<8x256xf32> -> vector<8x256xf32>
    %43 = arith.addf %38, %42 : vector<8x256xf32>
    %44 = vector.extract_strided_slice %32 {offsets = [16, 0], sizes = [8, 8], strides = [1, 1]} : vector<40x8xf32> to vector<8x8xf32>
    %c2 = arith.constant 2 : index
    %c0_26 = arith.constant 0 : index
    %c0_27 = arith.constant 0 : index
    %45 = vector.load %arg6[%c2, %c0_26, %c0_27] : memref<5x8x256xf32, #tpu.memory_space<vmem>>, vector<1x8x256xf32>
    %46 = vector.shape_cast %45 : vector<1x8x256xf32> to vector<8x256xf32>
    %cst_28 = arith.constant dense<0.000000e+00> : vector<8x256xf32>
    %47 = tpu.matmul %44, %46, %cst_28 {dimension_numbers = #tpu.dot_dimension_numbers<[1], [0], [0], [1], [0, 0, 1, 1], [], []>} : vector<8x8xf32>, vector<8x256xf32>, vector<8x256xf32> -> vector<8x256xf32>
    %48 = arith.addf %43, %47 : vector<8x256xf32>
    %49 = vector.extract_strided_slice %32 {offsets = [24, 0], sizes = [8, 8], strides = [1, 1]} : vector<40x8xf32> to vector<8x8xf32>
    %c3 = arith.constant 3 : index
    %c0_29 = arith.constant 0 : index
    %c0_30 = arith.constant 0 : index
    %50 = vector.load %arg6[%c3, %c0_29, %c0_30] : memref<5x8x256xf32, #tpu.memory_space<vmem>>, vector<1x8x256xf32>
    %51 = vector.shape_cast %50 : vector<1x8x256xf32> to vector<8x256xf32>
    %cst_31 = arith.constant dense<0.000000e+00> : vector<8x256xf32>
    %52 = tpu.matmul %49, %51, %cst_31 {dimension_numbers = #tpu.dot_dimension_numbers<[1], [0], [0], [1], [0, 0, 1, 1], [], []>} : vector<8x8xf32>, vector<8x256xf32>, vector<8x256xf32> -> vector<8x256xf32>
    %53 = arith.addf %48, %52 : vector<8x256xf32>
    %54 = vector.extract_strided_slice %32 {offsets = [32, 0], sizes = [8, 8], strides = [1, 1]} : vector<40x8xf32> to vector<8x8xf32>
    %c4 = arith.constant 4 : index
    %c0_32 = arith.constant 0 : index
    %c0_33 = arith.constant 0 : index
    %55 = vector.load %arg6[%c4, %c0_32, %c0_33] : memref<5x8x256xf32, #tpu.memory_space<vmem>>, vector<1x8x256xf32>
    %56 = vector.shape_cast %55 : vector<1x8x256xf32> to vector<8x256xf32>
    %cst_34 = arith.constant dense<0.000000e+00> : vector<8x256xf32>
    %57 = tpu.matmul %54, %56, %cst_34 {dimension_numbers = #tpu.dot_dimension_numbers<[1], [0], [0], [1], [0, 0, 1, 1], [], []>} : vector<8x8xf32>, vector<8x256xf32>, vector<8x256xf32> -> vector<8x256xf32>
    %58 = arith.addf %53, %57 : vector<8x256xf32>
    %c0_35 = arith.constant 0 : index
    %c0_36 = arith.constant 0 : index
    %59 = vector.load %arg7[%c0_35, %c0_36] : memref<1x256xf32, #tpu.memory_space<vmem>>, vector<1x256xf32>
    %60 = vector.broadcast %59 : vector<1x256xf32> to vector<8x256xf32>
    %61 = arith.addf %58, %60 : vector<8x256xf32>
    %c0_37 = arith.constant 0 : index
    %c0_38 = arith.constant 0 : index
    %62 = vector.load %arg8[%c0_37, %c0_38] : memref<8x256xf32, #tpu.memory_space<vmem>>, vector<8x256xf32>
    tpu.vector_store %arg8[%c0_37, %c0_38], %61 {strides = array<i32>} : memref<8x256xf32, #tpu.memory_space<vmem>>, vector<8x256xf32>,
    return
  }
}

</mosaic_0001>

<llo_original>
// kernel: mul.20
$region0: #{mul.20}
  %s0 = inlined_call_operand.vmem [shape: f32[2,8], index: 0, kind: input, shape index: {}]
  %s1 = inlined_call_operand.vmem [shape: f32[16], index: 1, kind: output, shape index: {}]
  $region1: #{mul.20} parent=0
    #allocation0 [shape = 'u8[4096]{0}', space=vmem, size = 0x1000, scoped, tag = 'scoped mem for output reshape']
    #allocation1 [shape = 'u8[4096]{0}', space=vmem, size = 0x1000, scoped, tag = 'scoped mem for input reshape']
    %s3 = ssub.s32 4, 1
    %v4 = vld [vmem:[%s0] sm:%s3]
    %5 = vst [vmem:[#allocation1] sm:%s3] %v4
    %v6 = vld [vmem:[#allocation1] sm:$0x1]
    %vm7 = vcmask 64512
    %8 = vst.msk [vmem:[#allocation0] sm:$0x1] %vm7, %v6
    %s9 = scalar_lea.vmem [#allocation1], 1
    %v10 = vld [vmem:[%s9] sm:$0x1]
    %11 = vrot.lane.b32.xlu0 %v10, 8
    %v12 = vpop.permute.xlu0 %11
    %vm13 = vcmask 130112
    %14 = vst.msk [vmem:[#allocation0] sm:$0x1] %vm13, %v12
    %s16 = ssub.s32 2, 1
    %v17 = vld [vmem:[#allocation0] sm:%s16]
    %s19 = ssub.s32 2, 1
    %20 = vst [vmem:[%s1] sm:%s19] %v17

// kernel: forward.1
$region0: #{forward.1}
  #allocation0 [shape = 'u32[]', space=smem, size = 0x4, offset = 0x4, fixed_abs, tag = 'smem constant byte address 0x4 - core index']
  #allocation1 [shape = 'u32[72,128]{1,0:T(1,128)}', space=vmem, size = 0x9000, scoped, tag = 'internal scratch']
  %s0 = inlined_call_operand.vmem [shape: f32[40,5], index: 0, kind: input, shape index: {}]
  %s1 = inlined_call_operand.vmem [shape: f32[40,1], index: 1, kind: input, shape index: {}]
  %s2 = inlined_call_operand.vmem [shape: f32[5,16], index: 2, kind: input, shape index: {}]
  %s3 = inlined_call_operand.vmem [shape: f32[16,16], index: 3, kind: input, shape index: {}]
  %s4 = inlined_call_operand.vmem [shape: f32[1,8], index: 4, kind: input, shape index: {}]
  %s5 = inlined_call_operand.vmem [shape: f32[1,16], index: 5, kind: input, shape index: {}]
  %s6 = inlined_call_operand.vmem [shape: f32[5,8,256], index: 6, kind: input, shape index: {}]
  %s7 = inlined_call_operand.vmem [shape: f32[1,256], index: 7, kind: input, shape index: {}]
  %s8 = inlined_call_operand.vmem [shape: f32[8,256], index: 8, kind: output, shape index: {}]
  %s9 = sld [smem:[#allocation0]]
  $region42: #{forward.1} parent=0
    _
  %s11 = ssub.s32 1, %s9
  %s12 = scalar_select 0, %s11, %s9
  // Predicated region
  $region2: #{forward.1} parent=0 // pred_check
    _
  $region3: #{forward.1} parent=0 // pred_check_branch
    %14 = sbr.rel (0) target = $region5
  $region4: #{forward.1} parent=0 // pred_region
    _
  $region5: #{forward.1} parent=0 // pred_fallthru
    _
  // Predicated region
  $region6: #{forward.1} parent=0 // pred_check
    _
  $region7: #{forward.1} parent=0 // pred_check_branch
    %16 = sbr.rel (0) target = $region9
  $region8: #{forward.1} parent=0 // pred_region
    _
  $region9: #{forward.1} parent=0 // pred_fallthru
    _
  // Predicated region
  $region10: #{forward.1} parent=0 // pred_check
    _
  $region11: #{forward.1} parent=0 // pred_check_branch
    %18 = sbr.rel (0) target = $region13
  $region12: #{forward.1} parent=0 // pred_region
    _
  $region13: #{forward.1} parent=0 // pred_fallthru
    _
  // Predicated region
  $region14: #{forward.1} parent=0 // pred_check
    _
  $region15: #{forward.1} parent=0 // pred_check_branch
    %20 = sbr.rel (0) target = $region17
  $region16: #{forward.1} parent=0 // pred_region
    _
  $region17: #{forward.1} parent=0 // pred_fallthru
    _
  // Predicated region
  $region18: #{forward.1} parent=0 // pred_check
    _
  $region19: #{forward.1} parent=0 // pred_check_branch
    %22 = sbr.rel (0) target = $region21
  $region20: #{forward.1} parent=0 // pred_region
    _
  $region21: #{forward.1} parent=0 // pred_fallthru
    _
  // Predicated region
  $region22: #{forward.1} parent=0 // pred_check
    _
  $region23: #{forward.1} parent=0 // pred_check_branch
    %24 = sbr.rel (0) target = $region25
  $region24: #{forward.1} parent=0 // pred_region
    _
  $region25: #{forward.1} parent=0 // pred_fallthru
    _
  // Predicated region
  $region26: #{forward.1} parent=0 // pred_check
    _
  $region27: #{forward.1} parent=0 // pred_check_branch
    %26 = sbr.rel (0) target = $region29
  $region28: #{forward.1} parent=0 // pred_region
    _
  $region29: #{forward.1} parent=0 // pred_fallthru
    _
  // Predicated region
  $region30: #{forward.1} parent=0 // pred_check
    _
  $region31: #{forward.1} parent=0 // pred_check_branch
    %28 = sbr.rel (0) target = $region33
  $region32: #{forward.1} parent=0 // pred_region
    _
  $region33: #{forward.1} parent=0 // pred_fallthru
    _
  %v29 = vld [vmem:[%s0] sm:$0xff]
  %v30 = vld [vmem:[%s0 + $0x8] sm:$0xff]
  %v31 = vld [vmem:[%s0 + $0x10] sm:$0xff]
  %v32 = vld [vmem:[%s0 + $0x18] sm:$0xff]
  %v33 = vld [vmem:[%s0 + $0x20] sm:$0xff]
  %v34 = vld [vmem:[%s2] sm:$0x1f]
  %v35 = vld [vmem:[%s1] sm:$0xff]
  %v36 = vld [vmem:[%s1 + $0x8] sm:$0xff]
  %v37 = vld [vmem:[%s1 + $0x10] sm:$0xff]
  %v38 = vld [vmem:[%s1 + $0x18] sm:$0xff]
  %v39 = vld [vmem:[%s1 + $0x20] sm:$0xff]
  %41 = vset.pattern.permute.xlu0 0
  %42 = vperm.xlu0 %41, %v35
  %v43 = vpop.permute.xlu0 %42
  %46 = vset.pattern.permute.xlu0 0
  %47 = vperm.xlu0 %46, %v36
  %v48 = vpop.permute.xlu0 %47
  %51 = vset.pattern.permute.xlu0 0
  %52 = vperm.xlu0 %51, %v37
  %v53 = vpop.permute.xlu0 %52
  %56 = vset.pattern.permute.xlu0 0
  %57 = vperm.xlu0 %56, %v38
  %v58 = vpop.permute.xlu0 %57
  %61 = vset.pattern.permute.xlu0 0
  %62 = vperm.xlu0 %61, %v39
  %v63 = vpop.permute.xlu0 %62
  %vm65 = vcmask 39936
  %v67 = vsel %vm65, %v29, 0
  %v70 = vsel %vm65, %v30, 0
  %v73 = vsel %vm65, %v31, 0
  %v76 = vsel %vm65, %v32, 0
  %v79 = vsel %vm65, %v33, 0
  %vm81 = vcmask 1044480
  %v83 = vsel %vm81, %v34, 0
  %85 = vmatpush.msra.mxu0 0.0
  %86 = vmatpush.msra.mxu0 0.0
  %87 = vmatpush.msra.mxu0 0.0
  %88 = vmatpush.msra.mxu0 0.0
  %89 = vmatpush.msra.mxu0 0.0
  %90 = vmatpush.msra.mxu0 0.0
  %91 = vmatpush.msra.mxu0 0.0
  %92 = vmatpush.msra.mxu0 0.0
  %93 = vmatpush.msra.mxu0 0.0
  %94 = vmatpush.msra.mxu0 0.0
  %95 = vmatpush.msra.mxu0 0.0
  %96 = vmatpush.msra.mxu0 0.0
  %97 = vmatpush.msra.mxu0 0.0
  %98 = vmatpush.msra.mxu0 0.0
  %99 = vmatpush.msra.mxu0 0.0
  %100 = vmatpush.msra.mxu0 %v83
  %101 = vmatmul.f32.gmra.mxu0 %v67
  %v102 = vpop.f32.mrf.mxu0
  %v103 = vadd.f32 %v43, %v102
  %104 = vmatmul.f32.gmra.mxu0 %v70
  %v105 = vpop.f32.mrf.mxu0
  %v106 = vadd.f32 %v48, %v105
  %107 = vmatmul.f32.gmra.mxu0 %v73
  %v108 = vpop.f32.mrf.mxu0
  %v109 = vadd.f32 %v53, %v108
  %110 = vmatmul.f32.gmra.mxu0 %v76
  %v111 = vpop.f32.mrf.mxu0
  %v112 = vadd.f32 %v58, %v111
  %113 = vmatmul.f32.gmra.mxu0 %v79
  %v114 = vpop.f32.mrf.mxu0
  %v115 = vadd.f32 %v63, %v114
  %116 = vdwg.mxu0
  %v117 = vld [vmem:[%s5] sm:$0x1]
  %vm118 = vcmp.gt.f32.partialorder %v117, 0.0
  %v119 = vsel %vm118, 1, 0
  %v120 = vperm.slane %v119, 0
  %vm121 = vcmp.eq.s32.totalorder %v120, 1
  %v122 = vsel %vm121, %v103, -1e+30
  %v123 = vsel %vm121, %v106, -1e+30
  %v124 = vsel %vm121, %v109, -1e+30
  %v125 = vsel %vm121, %v112, -1e+30
  %v126 = vsel %vm121, %v115, -1e+30
  %vm127 = vcmask 130048
  %v128 = vsel %vm127, %v122, -inf
  %129 = vmax.xlane.f32.xlu0 %v128
  %v130 = vpop.xlane.xlu0 %129
  %v131 = vsel %vm127, %v123, -inf
  %132 = vmax.xlane.f32.xlu0 %v131
  %v133 = vpop.xlane.xlu0 %132
  %v134 = vsel %vm127, %v124, -inf
  %135 = vmax.xlane.f32.xlu0 %v134
  %v136 = vpop.xlane.xlu0 %135
  %v137 = vsel %vm127, %v125, -inf
  %138 = vmax.xlane.f32.xlu0 %v137
  %v139 = vpop.xlane.xlu0 %138
  %v140 = vsel %vm127, %v126, -inf
  %141 = vmax.xlane.f32.xlu0 %v140
  %v142 = vpop.xlane.xlu0 %141
  %v143 = vsub.f32 %v122, %v130
  %v144 = vsub.f32 %v123, %v133
  %v145 = vsub.f32 %v124, %v136
  %v146 = vsub.f32 %v125, %v139
  %v147 = vsub.f32 %v126, %v142
  %v148 = vmul.f32 %v143, 1.442695
  %v149 = vpow.pop %v148
  %v150 = vmul.f32 %v144, 1.442695
  %v151 = vpow.pop %v150
  %v152 = vmul.f32 %v145, 1.442695
  %v153 = vpow.pop %v152
  %v154 = vmul.f32 %v146, 1.442695
  %v155 = vpow.pop %v154
  %v156 = vmul.f32 %v147, 1.442695
  %v157 = vpow.pop %v156
  %v158 = vld [vmem:[%s3] sm:$0xff]
  %v159 = vld [vmem:[%s3 + $0x8] sm:$0xff]
  %v161 = vsel %vm127, %v149, 0
  %v164 = vsel %vm127, %v151, 0
  %v167 = vsel %vm127, %v153, 0
  %v170 = vsel %vm127, %v155, 0
  %v173 = vsel %vm127, %v157, 0
  %175 = vmatpush.msra.mxu0 0.0
  %176 = vmatpush.msra.mxu0 0.0
  %177 = vmatpush.msra.mxu0 0.0
  %178 = vmatpush.msra.mxu0 0.0
  %179 = vmatpush.msra.mxu0 0.0
  %180 = vmatpush.msra.mxu0 0.0
  %181 = vmatpush.msra.mxu0 0.0
  %182 = vmatpush.msra.mxu0 0.0
  %183 = vmatpush.msra.mxu0 0.0
  %184 = vmatpush.msra.mxu0 0.0
  %185 = vmatpush.msra.mxu0 0.0
  %186 = vmatpush.msra.mxu0 0.0
  %187 = vmatpush.msra.mxu0 0.0
  %188 = vmatpush.msra.mxu0 0.0
  %189 = vmatpush.msra.mxu0 %v159
  %190 = vmatpush.msra.mxu0 %v158
  %191 = vmatmul.f32.gmra.mxu0 %v161
  %v192 = vpop.f32.mrf.mxu0
  %v193 = vadd.f32 0.0, %v192
  %194 = vmatmul.f32.gmra.mxu0 %v164
  %v195 = vpop.f32.mrf.mxu0
  %v196 = vadd.f32 0.0, %v195
  %197 = vmatmul.f32.gmra.mxu0 %v167
  %v198 = vpop.f32.mrf.mxu0
  %v199 = vadd.f32 0.0, %v198
  %200 = vmatmul.f32.gmra.mxu0 %v170
  %v201 = vpop.f32.mrf.mxu0
  %v202 = vadd.f32 0.0, %v201
  %203 = vmatmul.f32.gmra.mxu0 %v173
  %v204 = vpop.f32.mrf.mxu0
  %v205 = vadd.f32 0.0, %v204
  %206 = vdwg.mxu0
  %vm207 = vcmp.gt.f32.partialorder %v193, 0.0
  %vm208 = vcmp.gt.f32.partialorder %v196, 0.0
  %vm209 = vcmp.gt.f32.partialorder %v199, 0.0
  %vm210 = vcmp.gt.f32.partialorder %v202, 0.0
  %vm211 = vcmp.gt.f32.partialorder %v205, 0.0
  %v212 = vsel %vm207, %v193, 1.0
  %v213 = vsel %vm208, %v196, 1.0
  %v214 = vsel %vm209, %v199, 1.0
  %v215 = vsel %vm210, %v202, 1.0
  %v216 = vsel %vm211, %v205, 1.0
  %222 = vrot.lane.b32.xlu0 %v212, 120
  %v223 = vpop.permute.xlu0 %222
  %224 = vrot.lane.b32.xlu0 %v213, 120
  %v225 = vpop.permute.xlu0 %224
  %226 = vrot.lane.b32.xlu0 %v214, 120
  %v227 = vpop.permute.xlu0 %226
  %228 = vrot.lane.b32.xlu0 %v215, 120
  %v229 = vpop.permute.xlu0 %228
  %230 = vrot.lane.b32.xlu0 %v216, 120
  %v231 = vpop.permute.xlu0 %230
  %v237 = vrcp.pop %v223
  %v238 = vmul.f32 %v223, %v237
  %v239 = vsub.f32 1.0, %v238
  %v240 = vmul.f32 %v237, %v239
  %v241 = vadd.f32 %v237, %v240
  %vm242 = vweird.f32 %v223
  %vm243 = vweird.f32 %v237
  %vm244 = vmor %vm242, %vm243
  %v245 = vsel %vm244, %v237, %v241
  %v246 = vand.u32 2147483647, %v223
  %vm247 = vcmp.eq.f32.partialorder %v246, 8.507059e+37
  %v248 = vand.u32 %v223, 2147483648
  %v249 = vor.u32 1.1754944e-38, %v248
  %v250 = vsel %vm247, %v249, %v245
  %v251 = vmul.f32 %v193, %v250
  %v252 = vrcp.pop %v225
  %v253 = vmul.f32 %v225, %v252
  %v254 = vsub.f32 1.0, %v253
  %v255 = vmul.f32 %v252, %v254
  %v256 = vadd.f32 %v252, %v255
  %vm257 = vweird.f32 %v225
  %vm258 = vweird.f32 %v252
  %vm259 = vmor %vm257, %vm258
  %v260 = vsel %vm259, %v252, %v256
  %v261 = vand.u32 2147483647, %v225
  %vm262 = vcmp.eq.f32.partialorder %v261, 8.507059e+37
  %v263 = vand.u32 %v225, 2147483648
  %v264 = vor.u32 1.1754944e-38, %v263
  %v265 = vsel %vm262, %v264, %v260
  %v266 = vmul.f32 %v196, %v265
  %v267 = vrcp.pop %v227
  %v268 = vmul.f32 %v227, %v267
  %v269 = vsub.f32 1.0, %v268
  %v270 = vmul.f32 %v267, %v269
  %v271 = vadd.f32 %v267, %v270
  %vm272 = vweird.f32 %v227
  %vm273 = vweird.f32 %v267
  %vm274 = vmor %vm272, %vm273
  %v275 = vsel %vm274, %v267, %v271
  %v276 = vand.u32 2147483647, %v227
  %vm277 = vcmp.eq.f32.partialorder %v276, 8.507059e+37
  %v278 = vand.u32 %v227, 2147483648
  %v279 = vor.u32 1.1754944e-38, %v278
  %v280 = vsel %vm277, %v279, %v275
  %v281 = vmul.f32 %v199, %v280
  %v282 = vrcp.pop %v229
  %v283 = vmul.f32 %v229, %v282
  %v284 = vsub.f32 1.0, %v283
  %v285 = vmul.f32 %v282, %v284
  %v286 = vadd.f32 %v282, %v285
  %vm287 = vweird.f32 %v229
  %vm288 = vweird.f32 %v282
  %vm289 = vmor %vm287, %vm288
  %v290 = vsel %vm289, %v282, %v286
  %v291 = vand.u32 2147483647, %v229
  %vm292 = vcmp.eq.f32.partialorder %v291, 8.507059e+37
  %v293 = vand.u32 %v229, 2147483648
  %v294 = vor.u32 1.1754944e-38, %v293
  %v295 = vsel %vm292, %v294, %v290
  %v296 = vmul.f32 %v202, %v295
  %v297 = vrcp.pop %v231
  %v298 = vmul.f32 %v231, %v297
  %v299 = vsub.f32 1.0, %v298
  %v300 = vmul.f32 %v297, %v299
  %v301 = vadd.f32 %v297, %v300
  %vm302 = vweird.f32 %v231
  %vm303 = vweird.f32 %v297
  %vm304 = vmor %vm302, %vm303
  %v305 = vsel %vm304, %v297, %v301
  %v306 = vand.u32 2147483647, %v231
  %vm307 = vcmp.eq.f32.partialorder %v306, 8.507059e+37
  %v308 = vand.u32 %v231, 2147483648
  %v309 = vor.u32 1.1754944e-38, %v308
  %v310 = vsel %vm307, %v309, %v305
  %v311 = vmul.f32 %v205, %v310
  %v312 = vld [vmem:[%s4] sm:$0x1]
  %v314 = vperm.slane %v312, 0
  %320 = vrot.lane.b32.xlu0 %v251, 8
  %v321 = vpop.permute.xlu0 %320
  %322 = vrot.lane.b32.xlu0 %v266, 8
  %v323 = vpop.permute.xlu0 %322
  %324 = vrot.lane.b32.xlu0 %v281, 8
  %v325 = vpop.permute.xlu0 %324
  %326 = vrot.lane.b32.xlu0 %v296, 8
  %v327 = vpop.permute.xlu0 %326
  %328 = vrot.lane.b32.xlu0 %v311, 8
  %v329 = vpop.permute.xlu0 %328
  %335 = vrot.lane.b32.xlu0 %v314, 8
  %v336 = vpop.permute.xlu0 %335
  %v338 = vsel %vm207, %v321, %v336
  %v339 = vsel %vm208, %v323, %v336
  %v340 = vsel %vm209, %v325, %v336
  %v341 = vsel %vm210, %v327, %v336
  %v342 = vsel %vm211, %v329, %v336
  %v343 = vld [vmem:[%s6] sm:$0xff]
  %v344 = vld [vmem:[%s6 + $0x8] sm:$0xff]
  %s345 = scalar_lea.vmem %s6, 16
  %v346 = vld [vmem:[%s345] sm:$0xff]
  %v347 = vld [vmem:[%s345 + $0x8] sm:$0xff]
  %349 = vrot.lane.b32.xlu0 %v339, 120
  %v350 = vpop.permute.xlu0 %349
  %vm351 = vcmask 64512
  %v352 = vsel %vm351, %v350, 0
  %354 = vmatpush.msra.mxu0 0.0
  %355 = vmatpush.msra.mxu0 0.0
  %356 = vmatpush.msra.mxu0 0.0
  %357 = vmatpush.msra.mxu0 0.0
  %358 = vmatpush.msra.mxu0 0.0
  %359 = vmatpush.msra.mxu0 0.0
  %360 = vmatpush.msra.mxu0 0.0
  %361 = vmatpush.msra.mxu0 0.0
  %362 = vmatpush.msra.mxu0 0.0
  %363 = vmatpush.msra.mxu0 0.0
  %364 = vmatpush.msra.mxu0 0.0
  %365 = vmatpush.msra.mxu0 0.0
  %366 = vmatpush.msra.mxu0 0.0
  %367 = vmatpush.msra.mxu0 0.0
  %368 = vmatpush.msra.mxu0 0.0
  %369 = vmatpush.msra.mxu0 %v346
  %370 = vmatmul.f32.gmra.mxu0 %v352
  %v371 = vpop.f32.mrf.mxu0
  %v372 = vadd.f32 0.0, %v371
  %373 = vdwg.mxu0
  %374 = vmatpush.msra.mxu0 0.0
  %375 = vmatpush.msra.mxu0 0.0
  %376 = vmatpush.msra.mxu0 0.0
  %377 = vmatpush.msra.mxu0 0.0
  %378 = vmatpush.msra.mxu0 0.0
  %379 = vmatpush.msra.mxu0 0.0
  %380 = vmatpush.msra.mxu0 0.0
  %381 = vmatpush.msra.mxu0 0.0
  %382 = vmatpush.msra.mxu0 0.0
  %383 = vmatpush.msra.mxu0 0.0
  %384 = vmatpush.msra.mxu0 0.0
  %385 = vmatpush.msra.mxu0 0.0
  %386 = vmatpush.msra.mxu0 0.0
  %387 = vmatpush.msra.mxu0 0.0
  %388 = vmatpush.msra.mxu0 0.0
  %389 = vmatpush.msra.mxu0 %v347
  %390 = vmatmul.f32.gmra.mxu0 %v352
  %v391 = vpop.f32.mrf.mxu0
  %v392 = vadd.f32 0.0, %v391
  %393 = vdwg.mxu0
  %395 = vrot.lane.b32.xlu0 %v338, 120
  %v396 = vpop.permute.xlu0 %395
  %v397 = vsel %vm351, %v396, 0
  %399 = vmatpush.msra.mxu0 0.0
  %400 = vmatpush.msra.mxu0 0.0
  %401 = vmatpush.msra.mxu0 0.0
  %402 = vmatpush.msra.mxu0 0.0
  %403 = vmatpush.msra.mxu0 0.0
  %404 = vmatpush.msra.mxu0 0.0
  %405 = vmatpush.msra.mxu0 0.0
  %406 = vmatpush.msra.mxu0 0.0
  %407 = vmatpush.msra.mxu0 0.0
  %408 = vmatpush.msra.mxu0 0.0
  %409 = vmatpush.msra.mxu0 0.0
  %410 = vmatpush.msra.mxu0 0.0
  %411 = vmatpush.msra.mxu0 0.0
  %412 = vmatpush.msra.mxu0 0.0
  %413 = vmatpush.msra.mxu0 0.0
  %414 = vmatpush.msra.mxu0 %v343
  %415 = vmatmul.f32.gmra.mxu0 %v397
  %v416 = vpop.f32.mrf.mxu0
  %v417 = vadd.f32 %v372, %v416
  %418 = vdwg.mxu0
  %419 = vmatpush.msra.mxu0 0.0
  %420 = vmatpush.msra.mxu0 0.0
  %421 = vmatpush.msra.mxu0 0.0
  %422 = vmatpush.msra.mxu0 0.0
  %423 = vmatpush.msra.mxu0 0.0
  %424 = vmatpush.msra.mxu0 0.0
  %425 = vmatpush.msra.mxu0 0.0
  %426 = vmatpush.msra.mxu0 0.0
  %427 = vmatpush.msra.mxu0 0.0
  %428 = vmatpush.msra.mxu0 0.0
  %429 = vmatpush.msra.mxu0 0.0
  %430 = vmatpush.msra.mxu0 0.0
  %431 = vmatpush.msra.mxu0 0.0
  %432 = vmatpush.msra.mxu0 0.0
  %433 = vmatpush.msra.mxu0 0.0
  %434 = vmatpush.msra.mxu0 %v344
  %435 = vmatmul.f32.gmra.mxu0 %v397
  %v436 = vpop.f32.mrf.mxu0
  %v437 = vadd.f32 %v392, %v436
  %438 = vdwg.mxu0
  %s439 = scalar_lea.vmem %s6, 32
  %v440 = vld [vmem:[%s439] sm:$0xff]
  %v441 = vld [vmem:[%s439 + $0x8] sm:$0xff]
  %443 = vrot.lane.b32.xlu0 %v340, 120
  %v444 = vpop.permute.xlu0 %443
  %v445 = vsel %vm351, %v444, 0
  %447 = vmatpush.msra.mxu0 0.0
  %448 = vmatpush.msra.mxu0 0.0
  %449 = vmatpush.msra.mxu0 0.0
  %450 = vmatpush.msra.mxu0 0.0
  %451 = vmatpush.msra.mxu0 0.0
  %452 = vmatpush.msra.mxu0 0.0
  %453 = vmatpush.msra.mxu0 0.0
  %454 = vmatpush.msra.mxu0 0.0
  %455 = vmatpush.msra.mxu0 0.0
  %456 = vmatpush.msra.mxu0 0.0
  %457 = vmatpush.msra.mxu0 0.0
  %458 = vmatpush.msra.mxu0 0.0
  %459 = vmatpush.msra.mxu0 0.0
  %460 = vmatpush.msra.mxu0 0.0
  %461 = vmatpush.msra.mxu0 0.0
  %462 = vmatpush.msra.mxu0 %v440
  %463 = vmatmul.f32.gmra.mxu0 %v445
  %v464 = vpop.f32.mrf.mxu0
  %v465 = vadd.f32 0.0, %v464
  %466 = vdwg.mxu0
  %467 = vmatpush.msra.mxu0 0.0
  %468 = vmatpush.msra.mxu0 0.0
  %469 = vmatpush.msra.mxu0 0.0
  %470 = vmatpush.msra.mxu0 0.0
  %471 = vmatpush.msra.mxu0 0.0
  %472 = vmatpush.msra.mxu0 0.0
  %473 = vmatpush.msra.mxu0 0.0
  %474 = vmatpush.msra.mxu0 0.0
  %475 = vmatpush.msra.mxu0 0.0
  %476 = vmatpush.msra.mxu0 0.0
  %477 = vmatpush.msra.mxu0 0.0
  %478 = vmatpush.msra.mxu0 0.0
  %479 = vmatpush.msra.mxu0 0.0
  %480 = vmatpush.msra.mxu0 0.0
  %481 = vmatpush.msra.mxu0 0.0
  %482 = vmatpush.msra.mxu0 %v441
  %483 = vmatmul.f32.gmra.mxu0 %v445
  %v484 = vpop.f32.mrf.mxu0
  %v485 = vadd.f32 0.0, %v484
  %486 = vdwg.mxu0
  %v487 = vadd.f32 %v417, %v465
  %v488 = vadd.f32 %v437, %v485
  %s489 = scalar_lea.vmem %s6, 48
  %v490 = vld [vmem:[%s489] sm:$0xff]
  %v491 = vld [vmem:[%s489 + $0x8] sm:$0xff]
  %493 = vrot.lane.b32.xlu0 %v341, 120
  %v494 = vpop.permute.xlu0 %493
  %v495 = vsel %vm351, %v494, 0
  %497 = vmatpush.msra.mxu0 0.0
  %498 = vmatpush.msra.mxu0 0.0
  %499 = vmatpush.msra.mxu0 0.0
  %500 = vmatpush.msra.mxu0 0.0
  %501 = vmatpush.msra.mxu0 0.0
  %502 = vmatpush.msra.mxu0 0.0
  %503 = vmatpush.msra.mxu0 0.0
  %504 = vmatpush.msra.mxu0 0.0
  %505 = vmatpush.msra.mxu0 0.0
  %506 = vmatpush.msra.mxu0 0.0
  %507 = vmatpush.msra.mxu0 0.0
  %508 = vmatpush.msra.mxu0 0.0
  %509 = vmatpush.msra.mxu0 0.0
  %510 = vmatpush.msra.mxu0 0.0
  %511 = vmatpush.msra.mxu0 0.0
  %512 = vmatpush.msra.mxu0 %v490
  %513 = vmatmul.f32.gmra.mxu0 %v495
  %v514 = vpop.f32.mrf.mxu0
  %v515 = vadd.f32 0.0, %v514
  %516 = vdwg.mxu0
  %517 = vmatpush.msra.mxu0 0.0
  %518 = vmatpush.msra.mxu0 0.0
  %519 = vmatpush.msra.mxu0 0.0
  %520 = vmatpush.msra.mxu0 0.0
  %521 = vmatpush.msra.mxu0 0.0
  %522 = vmatpush.msra.mxu0 0.0
  %523 = vmatpush.msra.mxu0 0.0
  %524 = vmatpush.msra.mxu0 0.0
  %525 = vmatpush.msra.mxu0 0.0
  %526 = vmatpush.msra.mxu0 0.0
  %527 = vmatpush.msra.mxu0 0.0
  %528 = vmatpush.msra.mxu0 0.0
  %529 = vmatpush.msra.mxu0 0.0
  %530 = vmatpush.msra.mxu0 0.0
  %531 = vmatpush.msra.mxu0 0.0
  %532 = vmatpush.msra.mxu0 %v491
  %533 = vmatmul.f32.gmra.mxu0 %v495
  %v534 = vpop.f32.mrf.mxu0
  %v535 = vadd.f32 0.0, %v534
  %536 = vdwg.mxu0
  %v537 = vadd.f32 %v487, %v515
  %v538 = vadd.f32 %v488, %v535
  %s539 = scalar_lea.vmem %s6, 64
  %v540 = vld [vmem:[%s539] sm:$0xff]
  %v541 = vld [vmem:[%s539 + $0x8] sm:$0xff]
  %543 = vrot.lane.b32.xlu0 %v342, 120
  %v544 = vpop.permute.xlu0 %543
  %v545 = vsel %vm351, %v544, 0
  %547 = vmatpush.msra.mxu0 0.0
  %548 = vmatpush.msra.mxu0 0.0
  %549 = vmatpush.msra.mxu0 0.0
  %550 = vmatpush.msra.mxu0 0.0
  %551 = vmatpush.msra.mxu0 0.0
  %552 = vmatpush.msra.mxu0 0.0
  %553 = vmatpush.msra.mxu0 0.0
  %554 = vmatpush.msra.mxu0 0.0
  %555 = vmatpush.msra.mxu0 0.0
  %556 = vmatpush.msra.mxu0 0.0
  %557 = vmatpush.msra.mxu0 0.0
  %558 = vmatpush.msra.mxu0 0.0
  %559 = vmatpush.msra.mxu0 0.0
  %560 = vmatpush.msra.mxu0 0.0
  %561 = vmatpush.msra.mxu0 0.0
  %562 = vmatpush.msra.mxu0 %v540
  %563 = vmatmul.f32.gmra.mxu0 %v545
  %v564 = vpop.f32.mrf.mxu0
  %v565 = vadd.f32 0.0, %v564
  %566 = vdwg.mxu0
  %567 = vmatpush.msra.mxu0 0.0
  %568 = vmatpush.msra.mxu0 0.0
  %569 = vmatpush.msra.mxu0 0.0
  %570 = vmatpush.msra.mxu0 0.0
  %571 = vmatpush.msra.mxu0 0.0
  %572 = vmatpush.msra.mxu0 0.0
  %573 = vmatpush.msra.mxu0 0.0
  %574 = vmatpush.msra.mxu0 0.0
  %575 = vmatpush.msra.mxu0 0.0
  %576 = vmatpush.msra.mxu0 0.0
  %577 = vmatpush.msra.mxu0 0.0
  %578 = vmatpush.msra.mxu0 0.0
  %579 = vmatpush.msra.mxu0 0.0
  %580 = vmatpush.msra.mxu0 0.0
  %581 = vmatpush.msra.mxu0 0.0
  %582 = vmatpush.msra.mxu0 %v541
  %583 = vmatmul.f32.gmra.mxu0 %v545
  %v584 = vpop.f32.mrf.mxu0
  %v585 = vadd.f32 0.0, %v584
  %586 = vdwg.mxu0
  %v587 = vadd.f32 %v537, %v565
  %v588 = vadd.f32 %v538, %v585
  %v589 = vld [vmem:[%s7] sm:$0x3]
  %v591 = vperm.slane %v589, 0
  %v592 = vperm.slane %v589, 1
  %v595 = vadd.f32 %v587, %v591
  %v596 = vadd.f32 %v588, %v592
  %597 = vst [vmem:[%s8] sm:$0xff] %v595
  %598 = vst [vmem:[%s8 + $0x8] sm:$0xff] %v596
  // Predicated region
  $region34: #{forward.1} parent=0 // pred_check
    _
  $region35: #{forward.1} parent=0 // pred_check_branch
    %600 = sbr.rel (0) target = $region37
  $region36: #{forward.1} parent=0 // pred_region
    _
  $region37: #{forward.1} parent=0 // pred_fallthru
    _
  // Predicated region
  $region38: #{forward.1} parent=0 // pred_check
    _
  $region39: #{forward.1} parent=0 // pred_check_branch
    %602 = sbr.rel (0) target = $region41
  $region40: #{forward.1} parent=0 // pred_region
    _
  $region41: #{forward.1} parent=0 // pred_fallthru
    _

</llo_original>
